<compile_context>
chip_gen: v6e
topology: v6e:2x2x1
jax: 0.10.0
libtpu: 0.0.40
codegen_flags: <defaults>
</compile_context>

<pallas_src>
import functools

import jax
import jax.numpy as jnp
from jax.experimental import pallas as pl
from jax.experimental.pallas import tpu as pltpu

EMBEDDING_DIM = 256
N_LAYERS = 2          # number of hidden (embedding -> embedding) layers
LANE = 128
SUBLANE = 8


def _round_up(x, m):
    return ((x + m - 1) // m) * m


def _actor_mlp_kernel(s_ref, e_ref,
                      w1s_ref, w1e_ref, b1_ref,
                      w2_ref, b2_ref,
                      w3_ref, b3_ref,
                      w4_ref, b4_ref,
                      o_ref):
    """Fused 4-layer MLP + tanh. bf16 on the MXU, f32 epilogue on VPU/EUP."""
    # layer 1: split-K matmul replaces concat([state, e], -1)
    h = (jnp.dot(s_ref[...], w1s_ref[...], preferred_element_type=jnp.float32)
         + jnp.dot(e_ref[...], w1e_ref[...], preferred_element_type=jnp.float32))
    h = jnp.maximum(h + b1_ref[...], 0.0).astype(jnp.bfloat16)
    # layer 2: 256 -> 256, ReLU
    h = jnp.dot(h, w2_ref[...], preferred_element_type=jnp.float32)
    h = jnp.maximum(h + b2_ref[...], 0.0).astype(jnp.bfloat16)
    # layer 3: 256 -> 256, ReLU
    h = jnp.dot(h, w3_ref[...], preferred_element_type=jnp.float32)
    h = jnp.maximum(h + b3_ref[...], 0.0).astype(jnp.bfloat16)
    # output layer: 256 -> padded action_dim (128 lanes), then tanh
    a = jnp.dot(h, w4_ref[...], preferred_element_type=jnp.float32) + b4_ref[...]
    o_ref[...] = jnp.tanh(a).astype(o_ref.dtype)


def prepare_params(params, state_dim):
    """One-time conversion of raw f32 [in, out] params into kernel layout:
    w1 split into state/expert halves, last layer lane-padded to 128 columns,
    weights cast to bf16 (biases stay f32 for the f32 epilogue)."""
    action_dim = params["w4"].shape[1]
    padded_adim = _round_up(action_dim, LANE)

    w4p = jnp.zeros((EMBEDDING_DIM, padded_adim), jnp.float32)
    w4p = w4p.at[:, :action_dim].set(params["w4"])
    b4p = jnp.zeros((1, padded_adim), jnp.float32)
    b4p = b4p.at[:, :action_dim].set(params["b4"])

    return dict(
        w1s=params["w1"][:state_dim].astype(jnp.bfloat16),
        w1e=params["w1"][state_dim:].astype(jnp.bfloat16),
        b1=params["b1"].astype(jnp.float32),
        w2=params["w2"].astype(jnp.bfloat16),
        b2=params["b2"].astype(jnp.float32),
        w3=params["w3"].astype(jnp.bfloat16),
        b3=params["b3"].astype(jnp.float32),
        w4=w4p.astype(jnp.bfloat16),
        b4=b4p,                      # f32 (padded columns are 0 -> sliced off)
    )


@functools.partial(jax.jit, static_argnames=("action_dim", "block_b"))
def actor_ppo_forward(state, e, kparams, *, action_dim, block_b=256):
    """ActorPPO.forward for expert_mode == 1 (kernel-ready params from prepare_params)."""
    assert block_b % SUBLANE == 0
    batch, state_dim = state.shape
    expert_dim = e.shape[1]
    padded_adim = kparams["w4"].shape[1]

    # batch tiling: tile rows in multiples of 8, cap at block_b (VMEM-friendly
    # on v7x's 64 MiB and large enough to feed the 256-row MXU on v6e/v7x).
    tile_b = min(block_b, _round_up(batch, SUBLANE))
    padded_b = _round_up(batch, tile_b)

    s16 = state.astype(jnp.bfloat16)
    e16 = e.astype(jnp.bfloat16)
    if padded_b != batch:
        s16 = jnp.pad(s16, ((0, padded_b - batch), (0, 0)))
        e16 = jnp.pad(e16, ((0, padded_b - batch), (0, 0)))

    def row_spec(feat):
        # batch-tiled inputs / outputs
        return pl.BlockSpec((tile_b, feat), lambda i: (i, 0))

    def resident_spec(shape):
        # constant block index: weights/biases stay resident in VMEM across grid
        return pl.BlockSpec(shape, lambda i: (0, 0))

    out = pl.pallas_call(
        _actor_mlp_kernel,
        out_shape=jax.ShapeDtypeStruct((padded_b, padded_adim), jnp.float32),
        grid=(padded_b // tile_b,),
        in_specs=[
            row_spec(state_dim),                            # state tile
            row_spec(expert_dim),                           # expert tile
            resident_spec((state_dim, EMBEDDING_DIM)),      # w1_state
            resident_spec((expert_dim, EMBEDDING_DIM)),     # w1_e
            resident_spec((1, EMBEDDING_DIM)),              # b1
            resident_spec((EMBEDDING_DIM, EMBEDDING_DIM)),  # w2
            resident_spec((1, EMBEDDING_DIM)),              # b2
            resident_spec((EMBEDDING_DIM, EMBEDDING_DIM)),  # w3
            resident_spec((1, EMBEDDING_DIM)),              # b3
            resident_spec((EMBEDDING_DIM, padded_adim)),    # w4 (lane-padded)
            resident_spec((1, padded_adim)),                # b4 (lane-padded)
        ],
        out_specs=row_spec(padded_adim),
        compiler_params=pltpu.CompilerParams(
            dimension_semantics=("parallel",)),             # megacore on v7x
    )(s16, e16,
      kparams["w1s"], kparams["w1e"], kparams["b1"],
      kparams["w2"], kparams["b2"],
      kparams["w3"], kparams["b3"],
      kparams["w4"], kparams["b4"])

    # drop batch padding and the lane padding of the action dimension
    return out[:batch, :action_dim]


def init_params(state_dim, expert_dim, action_dim, key):
    """Deterministic synthetic parameter init (shapes match ActorPPO, expert_mode=1)."""
    ks = jax.random.split(key, 8)
    in_dim = state_dim + expert_dim

    def lin(kw, kb, fan_in, fan_out, std):
        w = jax.random.normal(kw, (fan_in, fan_out), jnp.float32) * std
        b = jax.random.normal(kb, (1, fan_out), jnp.float32) * 0.01
        return w, b

    w1, b1 = lin(ks[0], ks[1], in_dim, EMBEDDING_DIM, 1.0 / jnp.sqrt(in_dim))
    w2, b2 = lin(ks[2], ks[3], EMBEDDING_DIM, EMBEDDING_DIM,
                 1.0 / jnp.sqrt(EMBEDDING_DIM))
    w3, b3 = lin(ks[4], ks[5], EMBEDDING_DIM, EMBEDDING_DIM,
                 1.0 / jnp.sqrt(EMBEDDING_DIM))
    # TODO(synk): exact torch orthogonal_ init (std=0.1) not reproduced;
    # deterministic gaussian*0.1 used. Bias const 1e-6 matches layer_init_with_orthogonal.
    w4 = jax.random.normal(ks[6], (EMBEDDING_DIM, action_dim), jnp.float32) * 0.1
    b4 = jnp.full((1, action_dim), 1e-6, jnp.float32)
    return dict(w1=w1, b1=b1, w2=w2, b2=b2, w3=w3, b3=b3, w4=w4, b4=b4)


def reference_forward(state, e, params):
    """Pure-JAX f32 reference for verification."""
    x = jnp.concatenate([state, e], axis=-1)
    h = jnp.maximum(x @ params["w1"] + params["b1"], 0.0)
    h = jnp.maximum(h @ params["w2"] + params["b2"], 0.0)
    h = jnp.maximum(h @ params["w3"] + params["b3"], 0.0)
    return jnp.tanh(h @ params["w4"] + params["b4"])


if __name__ == "__main__":
    state_dim, expert_dim, action_dim = 32, 8, 4
    batch = 8

    key = jax.random.PRNGKey(0)
    k_state, k_e, k_params = jax.random.split(key, 3)

    state = jax.random.normal(k_state, (batch, state_dim), jnp.float32)
    e = jax.random.normal(k_e, (batch, expert_dim), jnp.float32)
    params = init_params(state_dim, expert_dim, action_dim, k_params)
    kparams = prepare_params(params, state_dim)   # one-time layout/dtype prep

    out = actor_ppo_forward(state, e, kparams, action_dim=action_dim)
    out = jax.block_until_ready(out)

    ref = reference_forward(state, e, params)
    assert out.shape == (batch, action_dim)
    # bf16 MXU path: tolerance loosened vs. the f32 reference.
    assert jnp.allclose(out, ref, atol=3e-2, rtol=3e-2), "mismatch vs JAX reference"

    print("KERNEL_OK")
</pallas_src>

<mosaic_0001>
module attributes {stable_mosaic.version = 11 : i64} {
  func.func @_actor_mlp_kernel(%arg0: i32, %arg1: memref<8x32xbf16, #tpu.memory_space<vmem>>, %arg2: memref<8x8xbf16, #tpu.memory_space<vmem>>, %arg3: memref<32x256xbf16, #tpu.memory_space<vmem>>, %arg4: memref<8x256xbf16, #tpu.memory_space<vmem>>, %arg5: memref<1x256xf32, #tpu.memory_space<vmem>>, %arg6: memref<256x256xbf16, #tpu.memory_space<vmem>>, %arg7: memref<1x256xf32, #tpu.memory_space<vmem>>, %arg8: memref<256x256xbf16, #tpu.memory_space<vmem>>, %arg9: memref<1x256xf32, #tpu.memory_space<vmem>>, %arg10: memref<256x128xbf16, #tpu.memory_space<vmem>>, %arg11: memref<1x128xf32, #tpu.memory_space<vmem>>, %arg12: memref<8x128xf32, #tpu.memory_space<vmem>>) attributes {dimension_semantics = [#tpu.dimension_semantics<parallel>], iteration_bounds = array<i64: 1>, scalar_prefetch = 0 : i64, scratch_operands = 0 : i64, tpu.core_type = #tpu.core_type<tc>, window_params = [{transform_indices = @transform_0, window_bounds = array<i64: 8, 32>}, {transform_indices = @transform_1, window_bounds = array<i64: 8, 8>}, {pipeline_mode = #tpu.pipeline_mode<synchronous>, transform_indices = @transform_2, window_bounds = array<i64: 32, 256>}, {pipeline_mode = #tpu.pipeline_mode<synchronous>, transform_indices = @transform_3, window_bounds = array<i64: 8, 256>}, {pipeline_mode = #tpu.pipeline_mode<synchronous>, transform_indices = @transform_4, window_bounds = array<i64: 1, 256>}, {pipeline_mode = #tpu.pipeline_mode<synchronous>, transform_indices = @transform_5, window_bounds = array<i64: 256, 256>}, {pipeline_mode = #tpu.pipeline_mode<synchronous>, transform_indices = @transform_6, window_bounds = array<i64: 1, 256>}, {pipeline_mode = #tpu.pipeline_mode<synchronous>, transform_indices = @transform_7, window_bounds = array<i64: 256, 256>}, {pipeline_mode = #tpu.pipeline_mode<synchronous>, transform_indices = @transform_8, window_bounds = array<i64: 1, 256>}, {pipeline_mode = #tpu.pipeline_mode<synchronous>, transform_indices = @transform_9, window_bounds = array<i64: 256, 128>}, {pipeline_mode = #tpu.pipeline_mode<synchronous>, transform_indices = @transform_10, window_bounds = array<i64: 1, 128>}, {transform_indices = @transform_11, window_bounds = array<i64: 8, 128>}]} {
    %c0 = arith.constant 0 : index
    %c0_0 = arith.constant 0 : index
    %0 = vector.load %arg1[%c0, %c0_0] : memref<8x32xbf16, #tpu.memory_space<vmem>>, vector<8x32xbf16>
    %c0_1 = arith.constant 0 : index
    %c0_2 = arith.constant 0 : index
    %1 = vector.load %arg3[%c0_1, %c0_2] : memref<32x256xbf16, #tpu.memory_space<vmem>>, vector<32x256xbf16>
    %cst = arith.constant dense<0.000000e+00> : vector<8x256xf32>
    %2 = tpu.matmul %0, %1, %cst {dimension_numbers = #tpu.dot_dimension_numbers<[1], [0], [0], [1], [0, 0, 1, 1], [], []>} : vector<8x32xbf16>, vector<32x256xbf16>, vector<8x256xf32> -> vector<8x256xf32>
    %c0_3 = arith.constant 0 : index
    %c0_4 = arith.constant 0 : index
    %3 = vector.load %arg2[%c0_3, %c0_4] : memref<8x8xbf16, #tpu.memory_space<vmem>>, vector<8x8xbf16>
    %c0_5 = arith.constant 0 : index
    %c0_6 = arith.constant 0 : index
    %4 = vector.load %arg4[%c0_5, %c0_6] : memref<8x256xbf16, #tpu.memory_space<vmem>>, vector<8x256xbf16>
    %cst_7 = arith.constant dense<0.000000e+00> : vector<8x256xf32>
    %5 = tpu.matmul %3, %4, %cst_7 {dimension_numbers = #tpu.dot_dimension_numbers<[1], [0], [0], [1], [0, 0, 1, 1], [], []>} : vector<8x8xbf16>, vector<8x256xbf16>, vector<8x256xf32> -> vector<8x256xf32>
    %6 = arith.addf %2, %5 : vector<8x256xf32>
    %c0_8 = arith.constant 0 : index
    %c0_9 = arith.constant 0 : index
    %7 = vector.load %arg5[%c0_8, %c0_9] : memref<1x256xf32, #tpu.memory_space<vmem>>, vector<1x256xf32>
    %8 = vector.broadcast %7 : vector<1x256xf32> to vector<8x256xf32>
    %9 = arith.addf %6, %8 : vector<8x256xf32>
    %cst_10 = arith.constant 0.000000e+00 : f32
    %10 = vector.broadcast %cst_10 : f32 to vector<8x256xf32>
    %11 = arith.maximumf %9, %10 : vector<8x256xf32>
    %12 = arith.truncf %11 : vector<8x256xf32> to vector<8x256xbf16>
    %c0_11 = arith.constant 0 : index
    %c0_12 = arith.constant 0 : index
    %13 = vector.load %arg6[%c0_11, %c0_12] : memref<256x256xbf16, #tpu.memory_space<vmem>>, vector<256x256xbf16>
    %cst_13 = arith.constant dense<0.000000e+00> : vector<8x256xf32>
    %14 = tpu.matmul %12, %13, %cst_13 {dimension_numbers = #tpu.dot_dimension_numbers<[1], [0], [0], [1], [0, 0, 1, 1], [], []>} : vector<8x256xbf16>, vector<256x256xbf16>, vector<8x256xf32> -> vector<8x256xf32>
    %c0_14 = arith.constant 0 : index
    %c0_15 = arith.constant 0 : index
    %15 = vector.load %arg7[%c0_14, %c0_15] : memref<1x256xf32, #tpu.memory_space<vmem>>, vector<1x256xf32>
    %16 = vector.broadcast %15 : vector<1x256xf32> to vector<8x256xf32>
    %17 = arith.addf %14, %16 : vector<8x256xf32>
    %cst_16 = arith.constant 0.000000e+00 : f32
    %18 = vector.broadcast %cst_16 : f32 to vector<8x256xf32>
    %19 = arith.maximumf %17, %18 : vector<8x256xf32>
    %20 = arith.truncf %19 : vector<8x256xf32> to vector<8x256xbf16>
    %c0_17 = arith.constant 0 : index
    %c0_18 = arith.constant 0 : index
    %21 = vector.load %arg8[%c0_17, %c0_18] : memref<256x256xbf16, #tpu.memory_space<vmem>>, vector<256x256xbf16>
    %cst_19 = arith.constant dense<0.000000e+00> : vector<8x256xf32>
    %22 = tpu.matmul %20, %21, %cst_19 {dimension_numbers = #tpu.dot_dimension_numbers<[1], [0], [0], [1], [0, 0, 1, 1], [], []>} : vector<8x256xbf16>, vector<256x256xbf16>, vector<8x256xf32> -> vector<8x256xf32>
    %c0_20 = arith.constant 0 : index
    %c0_21 = arith.constant 0 : index
    %23 = vector.load %arg9[%c0_20, %c0_21] : memref<1x256xf32, #tpu.memory_space<vmem>>, vector<1x256xf32>
    %24 = vector.broadcast %23 : vector<1x256xf32> to vector<8x256xf32>
    %25 = arith.addf %22, %24 : vector<8x256xf32>
    %cst_22 = arith.constant 0.000000e+00 : f32
    %26 = vector.broadcast %cst_22 : f32 to vector<8x256xf32>
    %27 = arith.maximumf %25, %26 : vector<8x256xf32>
    %28 = arith.truncf %27 : vector<8x256xf32> to vector<8x256xbf16>
    %c0_23 = arith.constant 0 : index
    %c0_24 = arith.constant 0 : index
    %29 = vector.load %arg10[%c0_23, %c0_24] : memref<256x128xbf16, #tpu.memory_space<vmem>>, vector<256x128xbf16>
    %cst_25 = arith.constant dense<0.000000e+00> : vector<8x128xf32>
    %30 = tpu.matmul %28, %29, %cst_25 {dimension_numbers = #tpu.dot_dimension_numbers<[1], [0], [0], [1], [0, 0, 1, 1], [], []>} : vector<8x256xbf16>, vector<256x128xbf16>, vector<8x128xf32> -> vector<8x128xf32>
    %c0_26 = arith.constant 0 : index
    %c0_27 = arith.constant 0 : index
    %31 = vector.load %arg11[%c0_26, %c0_27] : memref<1x128xf32, #tpu.memory_space<vmem>>, vector<1x128xf32>
    %32 = vector.broadcast %31 : vector<1x128xf32> to vector<8x128xf32>
    %33 = arith.addf %30, %32 : vector<8x128xf32>
    %34 = math.tanh %33 : vector<8x128xf32>
    %c0_28 = arith.constant 0 : index
    %c0_29 = arith.constant 0 : index
    %35 = vector.load %arg12[%c0_28, %c0_29] : memref<8x128xf32, #tpu.memory_space<vmem>>, vector<8x128xf32>
    tpu.vector_store %arg12[%c0_28, %c0_29], %34 {strides = array<i32>} : memref<8x128xf32, #tpu.memory_space<vmem>>, vector<8x128xf32>,
    return
  }
  func.func @transform_0(%arg0: i32) -> (i32, i32) {
    %c0_i32 = arith.constant 0 : i32
    %c0_i32_0 = arith.constant 0 : i32
    return %arg0, %c0_i32 : i32, i32
  }
  func.func @transform_1(%arg0: i32) -> (i32, i32) {
    %c0_i32 = arith.constant 0 : i32
    %c0_i32_0 = arith.constant 0 : i32
    return %arg0, %c0_i32 : i32, i32
  }
  func.func @transform_2(%arg0: i32) -> (i32, i32) {
    %c0_i32 = arith.constant 0 : i32
    %c0_i32_0 = arith.constant 0 : i32
    %c0_i32_1 = arith.constant 0 : i32
    return %c0_i32, %c0_i32_0 : i32, i32
  }
  func.func @transform_3(%arg0: i32) -> (i32, i32) {
    %c0_i32 = arith.constant 0 : i32
    %c0_i32_0 = arith.constant 0 : i32
    %c0_i32_1 = arith.constant 0 : i32
    return %c0_i32, %c0_i32_0 : i32, i32
  }
  func.func @transform_4(%arg0: i32) -> (i32, i32) {
    %c0_i32 = arith.constant 0 : i32
    %c0_i32_0 = arith.constant 0 : i32
    %c0_i32_1 = arith.constant 0 : i32
    return %c0_i32, %c0_i32_0 : i32, i32
  }
  func.func @transform_5(%arg0: i32) -> (i32, i32) {
    %c0_i32 = arith.constant 0 : i32
    %c0_i32_0 = arith.constant 0 : i32
    %c0_i32_1 = arith.constant 0 : i32
    return %c0_i32, %c0_i32_0 : i32, i32
  }
  func.func @transform_6(%arg0: i32) -> (i32, i32) {
    %c0_i32 = arith.constant 0 : i32
    %c0_i32_0 = arith.constant 0 : i32
    %c0_i32_1 = arith.constant 0 : i32
    return %c0_i32, %c0_i32_0 : i32, i32
  }
  func.func @transform_7(%arg0: i32) -> (i32, i32) {
    %c0_i32 = arith.constant 0 : i32
    %c0_i32_0 = arith.constant 0 : i32
    %c0_i32_1 = arith.constant 0 : i32
    return %c0_i32, %c0_i32_0 : i32, i32
  }
  func.func @transform_8(%arg0: i32) -> (i32, i32) {
    %c0_i32 = arith.constant 0 : i32
    %c0_i32_0 = arith.constant 0 : i32
    %c0_i32_1 = arith.constant 0 : i32
    return %c0_i32, %c0_i32_0 : i32, i32
  }
  func.func @transform_9(%arg0: i32) -> (i32, i32) {
    %c0_i32 = arith.constant 0 : i32
    %c0_i32_0 = arith.constant 0 : i32
    %c0_i32_1 = arith.constant 0 : i32
    return %c0_i32, %c0_i32_0 : i32, i32
  }
  func.func @transform_10(%arg0: i32) -> (i32, i32) {
    %c0_i32 = arith.constant 0 : i32
    %c0_i32_0 = arith.constant 0 : i32
    %c0_i32_1 = arith.constant 0 : i32
    return %c0_i32, %c0_i32_0 : i32, i32
  }
  func.func @transform_11(%arg0: i32) -> (i32, i32) {
    %c0_i32 = arith.constant 0 : i32
    %c0_i32_0 = arith.constant 0 : i32
    return %arg0, %c0_i32 : i32, i32
  }
}

</mosaic_0001>

<llo_original>
// kernel: actor_ppo_forward.1
$region0: #{actor_ppo_forward.1}
  #allocation0 [shape = 'u32[]', space=smem, size = 0x4, offset = 0x4, fixed_abs, tag = 'smem constant byte address 0x4 - core index']
  #allocation1 [shape = 'u32[144,128]{1,0:T(1,128)}', space=vmem, size = 0x12000, scoped, tag = 'internal scratch']
  %s0 = inlined_call_operand.vmem [shape: bf16[8,32], index: 0, kind: input, shape index: {}]
  %s1 = inlined_call_operand.vmem [shape: bf16[8,8], index: 1, kind: input, shape index: {}]
  %s2 = inlined_call_operand.vmem [shape: bf16[32,256], index: 2, kind: input, shape index: {}]
  %s3 = inlined_call_operand.hbm [shape: bf16[8,256], index: 3, kind: input, shape index: {}]
  %s4 = inlined_call_operand.vmem [shape: f32[1,256], index: 4, kind: input, shape index: {}]
  %s5 = inlined_call_operand.hbm [shape: bf16[256,256], index: 5, kind: input, shape index: {}]
  %s6 = inlined_call_operand.vmem [shape: f32[1,256], index: 6, kind: input, shape index: {}]
  %s7 = inlined_call_operand.hbm [shape: bf16[256,256], index: 7, kind: input, shape index: {}]
  %s8 = inlined_call_operand.hbm [shape: f32[1,256], index: 8, kind: input, shape index: {}]
  %s9 = inlined_call_operand.hbm [shape: bf16[256,128], index: 9, kind: input, shape index: {}]
  %s10 = inlined_call_operand.hbm [shape: f32[1,128], index: 10, kind: input, shape index: {}]
  %s11 = inlined_call_operand.vmem [shape: f32[8,128], index: 11, kind: output, shape index: {}]
  %s12 = sld [smem:[#allocation0]]
  $region78: #{actor_ppo_forward.1} parent=0
    _
  %s14 = ssub.s32 1, %s12
  %s15 = scalar_select 0, %s14, %s12
  $region1: #{actor_ppo_forward.1} parent=0
    #allocation2 [shape = 'u8[4096]{0}', space=vmem, size = 0x1000, scoped, tag = 'input window, operand 3, single buffered']
    #allocation3 [shape = 's32[1]{0}', space=sflag, size = 0x4, scoped, tag = 'scoped memory for actor_ppo_forward.1']
    #allocation4 [shape = 'u8[131072]{0}', space=vmem, size = 0x20000, scoped, tag = 'input window, operand 5, single buffered']
    #allocation5 [shape = 's32[1]{0}', space=sflag, size = 0x4, scoped, tag = 'scoped memory for actor_ppo_forward.1']
    #allocation6 [shape = 'u8[131072]{0}', space=vmem, size = 0x20000, scoped, tag = 'input window, operand 7, single buffered']
    #allocation7 [shape = 'u8[1024]{0}', space=vmem, size = 0x400, scoped, tag = 'input window, operand 8, single buffered']
    #allocation8 [shape = 's32[1]{0}', space=sflag, size = 0x4, scoped, tag = 'scoped memory for actor_ppo_forward.1']
    #allocation9 [shape = 'u8[65536]{0}', space=vmem, size = 0x10000, scoped, tag = 'input window, operand 9, single buffered']
    #allocation10 [shape = 'u8[512]{0}', space=vmem, size = 0x400, scoped, tag = 'input window, operand 10, single buffered']
    #allocation11 [shape = 's32[1]{0}', space=sflag, size = 0x4, scoped, tag = 'scoped memory for actor_ppo_forward.1']
    %16 = vsyncpa [#allocation3], 0
    %17 = vsyncpa [#allocation5], 0
    %18 = vsyncpa [#allocation8], 0
    %19 = vsyncpa [#allocation11], 0
    // Predicated region
    $region2: #{actor_ppo_forward.1} parent=1 // pred_check
      _
    $region3: #{actor_ppo_forward.1} parent=1 // pred_check_branch
      %21 = sbr.rel (0) target = $region5
    $region4: #{actor_ppo_forward.1} parent=1 // pred_region
      _
    $region5: #{actor_ppo_forward.1} parent=1 // pred_fallthru
      _
    // Predicated region
    $region6: #{actor_ppo_forward.1} parent=1 // pred_check
      _
    $region7: #{actor_ppo_forward.1} parent=1 // pred_check_branch
      %23 = sbr.rel (0) target = $region9
    $region8: #{actor_ppo_forward.1} parent=1 // pred_region
      _
    $region9: #{actor_ppo_forward.1} parent=1 // pred_fallthru
      _
    // Predicated region
    $region10: #{actor_ppo_forward.1} parent=1 // pred_check
      _
    $region11: #{actor_ppo_forward.1} parent=1 // pred_check_branch
      %25 = sbr.rel (0) target = $region13
    $region12: #{actor_ppo_forward.1} parent=1 // pred_region
      _
    $region13: #{actor_ppo_forward.1} parent=1 // pred_fallthru
      _
    // Predicated region
    $region14: #{actor_ppo_forward.1} parent=1 // pred_check
      _
    $region15: #{actor_ppo_forward.1} parent=1 // pred_check_branch
      %27 = sbr.rel (0) target = $region17
    $region16: #{actor_ppo_forward.1} parent=1 // pred_region
      %s29 = ssub.s32 128, 128
      %30 = vsyncadd [#allocation3], %s29
      %s32 = sshll.u32 [#allocation2], 4
      %s33 = int_to_ptr.vmem [resolvable:$true] %s32
      %35 = dma.hbm_to_vmem [thread:$0]  %s3, 128, %s33, [#allocation3]
    $region17: #{actor_ppo_forward.1} parent=1 // pred_fallthru
      _
    // Predicated region
    $region18: #{actor_ppo_forward.1} parent=1 // pred_check
      _
    $region19: #{actor_ppo_forward.1} parent=1 // pred_check_branch
      %37 = sbr.rel (0) target = $region21
    $region20: #{actor_ppo_forward.1} parent=1 // pred_region
      _
    $region21: #{actor_ppo_forward.1} parent=1 // pred_fallthru
      _
    // Predicated region
    $region22: #{actor_ppo_forward.1} parent=1 // pred_check
      _
    $region23: #{actor_ppo_forward.1} parent=1 // pred_check_branch
      %39 = sbr.rel (0) target = $region25
    $region24: #{actor_ppo_forward.1} parent=1 // pred_region
      %s41 = ssub.s32 4096, 4096
      %42 = vsyncadd [#allocation5], %s41
      %s43 = sshll.u32 [#allocation4], 4
      %s44 = int_to_ptr.vmem [resolvable:$true] %s43
      %49 = dma.hbm_to_vmem [thread:$0]  %s5, 4096, %s44, [#allocation5], 128, 128, 8
    $region25: #{actor_ppo_forward.1} parent=1 // pred_fallthru
      _
    // Predicated region
    $region26: #{actor_ppo_forward.1} parent=1 // pred_check
      _
    $region27: #{actor_ppo_forward.1} parent=1 // pred_check_branch
      %51 = sbr.rel (0) target = $region29
    $region28: #{actor_ppo_forward.1} parent=1 // pred_region
      _
    $region29: #{actor_ppo_forward.1} parent=1 // pred_fallthru
      _
    // Predicated region
    $region30: #{actor_ppo_forward.1} parent=1 // pred_check
      _
    $region31: #{actor_ppo_forward.1} parent=1 // pred_check_branch
      %53 = sbr.rel (0) target = $region33
    $region32: #{actor_ppo_forward.1} parent=1 // pred_region
      %s55 = ssub.s32 4096, 4096
      %56 = vsyncadd [#allocation5], %s55
      %s57 = sshll.u32 [#allocation6], 4
      %s58 = int_to_ptr.vmem [resolvable:$true] %s57
      %63 = dma.hbm_to_vmem [thread:$0]  %s7, 4096, %s58, [#allocation5], 128, 128, 8
    $region33: #{actor_ppo_forward.1} parent=1 // pred_fallthru
      _
    // Predicated region
    $region34: #{actor_ppo_forward.1} parent=1 // pred_check
      _
    $region35: #{actor_ppo_forward.1} parent=1 // pred_check_branch
      %65 = sbr.rel (0) target = $region37
    $region36: #{actor_ppo_forward.1} parent=1 // pred_region
      %s67 = ssub.s32 32, 32
      %68 = vsyncadd [#allocation8], %s67
      %s70 = sshll.u32 [#allocation7], 4
      %s71 = int_to_ptr.vmem [resolvable:$true] %s70
      %73 = dma.hbm_to_vmem [thread:$0]  %s8, 32, %s71, [#allocation8]
    $region37: #{actor_ppo_forward.1} parent=1 // pred_fallthru
      _
    // Predicated region
    $region38: #{actor_ppo_forward.1} parent=1 // pred_check
      _
    $region39: #{actor_ppo_forward.1} parent=1 // pred_check_branch
      %75 = sbr.rel (0) target = $region41
    $region40: #{actor_ppo_forward.1} parent=1 // pred_region
      %s77 = ssub.s32 2048, 2048
      %78 = vsyncadd [#allocation8], %s77
      %s79 = sshll.u32 [#allocation9], 4
      %s80 = int_to_ptr.vmem [resolvable:$true] %s79
      %85 = dma.hbm_to_vmem [thread:$0]  %s9, 2048, %s80, [#allocation8], 64, 64, 4
    $region41: #{actor_ppo_forward.1} parent=1 // pred_fallthru
      _
    // Predicated region
    $region42: #{actor_ppo_forward.1} parent=1 // pred_check
      _
    $region43: #{actor_ppo_forward.1} parent=1 // pred_check_branch
      %87 = sbr.rel (0) target = $region45
    $region44: #{actor_ppo_forward.1} parent=1 // pred_region
      %s89 = ssub.s32 16, 16
      %90 = vsyncadd [#allocation11], %s89
      %s92 = sshll.u32 [#allocation10], 4
      %s93 = int_to_ptr.vmem [resolvable:$true] %s92
      %95 = dma.hbm_to_vmem [thread:$0]  %s10, 16, %s93, [#allocation11]
    $region45: #{actor_ppo_forward.1} parent=1 // pred_fallthru
      _
    // Predicated region
    $region46: #{actor_ppo_forward.1} parent=1 // pred_check
      _
    $region47: #{actor_ppo_forward.1} parent=1 // pred_check_branch
      %97 = sbr.rel (0) target = $region49
    $region48: #{actor_ppo_forward.1} parent=1 // pred_region
      %98 = dma.done [#allocation3], 128
    $region49: #{actor_ppo_forward.1} parent=1 // pred_fallthru
      _
    // Predicated region
    $region50: #{actor_ppo_forward.1} parent=1 // pred_check
      _
    $region51: #{actor_ppo_forward.1} parent=1 // pred_check_branch
      %100 = sbr.rel (0) target = $region53
    $region52: #{actor_ppo_forward.1} parent=1 // pred_region
      %101 = dma.done [#allocation5], 4096
    $region53: #{actor_ppo_forward.1} parent=1 // pred_fallthru
      _
    // Predicated region
    $region54: #{actor_ppo_forward.1} parent=1 // pred_check
      _
    $region55: #{actor_ppo_forward.1} parent=1 // pred_check_branch
      %103 = sbr.rel (0) target = $region57
    $region56: #{actor_ppo_forward.1} parent=1 // pred_region
      %104 = dma.done [#allocation5], 4096
    $region57: #{actor_ppo_forward.1} parent=1 // pred_fallthru
      _
    // Predicated region
    $region58: #{actor_ppo_forward.1} parent=1 // pred_check
      _
    $region59: #{actor_ppo_forward.1} parent=1 // pred_check_branch
      %106 = sbr.rel (0) target = $region61
    $region60: #{actor_ppo_forward.1} parent=1 // pred_region
      %107 = dma.done [#allocation8], 32
    $region61: #{actor_ppo_forward.1} parent=1 // pred_fallthru
      _
    // Predicated region
    $region62: #{actor_ppo_forward.1} parent=1 // pred_check
      _
    $region63: #{actor_ppo_forward.1} parent=1 // pred_check_branch
      %109 = sbr.rel (0) target = $region65
    $region64: #{actor_ppo_forward.1} parent=1 // pred_region
      %110 = dma.done [#allocation8], 2048
    $region65: #{actor_ppo_forward.1} parent=1 // pred_fallthru
      _
    // Predicated region
    $region66: #{actor_ppo_forward.1} parent=1 // pred_check
      _
    $region67: #{actor_ppo_forward.1} parent=1 // pred_check_branch
      %112 = sbr.rel (0) target = $region69
    $region68: #{actor_ppo_forward.1} parent=1 // pred_region
      %113 = dma.done [#allocation11], 16
    $region69: #{actor_ppo_forward.1} parent=1 // pred_fallthru
      _
    %v115 = vld [vmem:[%s0] sm:$0xf]
    %v116 = vld [vmem:[%s2] sm:$0xff]
    %v117 = vld [vmem:[%s2 + $0x8] sm:$0xff]
    %v118 = vld [vmem:[%s2 + $0x10] sm:$0xff]
    %v119 = vld [vmem:[%s2 + $0x18] sm:$0xff]
    %v120 = vld [vmem:[%s1] sm:$0xf]
    %v121 = vld [vmem:[#allocation2] sm:$0xff]
    %v123 = vunpack.c.l.b16 %v121
    %v124 = vunpack.c.h.b16 %v121
    %v125 = vpack.c.b16 %v123, %v123
    %v126 = vpack.c.b16 %v124, %v124
    %vm127 = vcmask 64512
    %v129 = vsel %vm127, %v120, 0
    %vm131 = vcmask 1043456
    %v133 = vsel %vm131, %v125, 0
    %v136 = vsel %vm131, %v126, 0
    %138 = vmatprep.subr.bf16.mxu0 0
    %139 = vmatpush1.bf16.msra.mxu0 0
    %140 = vmatprep.subr.bf16.mxu0 0
    %141 = vmatpush1.bf16.msra.mxu0 0
    %142 = vmatprep.subr.bf16.mxu0 0
    %143 = vmatpush1.bf16.msra.mxu0 0
    %144 = vmatprep.subr.bf16.mxu0 0
    %145 = vmatpush1.bf16.msra.mxu0 0
    %146 = vmatprep.subr.bf16.mxu0 0
    %147 = vmatpush1.bf16.msra.mxu0 0
    %148 = vmatprep.subr.bf16.mxu0 0
    %149 = vmatpush1.bf16.msra.mxu0 0
    %150 = vmatprep.subr.bf16.mxu0 0
    %151 = vmatpush1.bf16.msra.mxu0 0
    %152 = vmatprep.subr.bf16.mxu0 %v136
    %153 = vmatpush1.bf16.msra.mxu0 %v133
    %154 = vmatprep.subr.bf16.mxu0 0
    %155 = vmatpush2.bf16.msra.mxu0 0
    %156 = vmatprep.subr.bf16.mxu0 0
    %157 = vmatpush2.bf16.msra.mxu0 0
    %158 = vmatprep.subr.bf16.mxu0 0
    %159 = vmatpush2.bf16.msra.mxu0 0
    %160 = vmatprep.subr.bf16.mxu0 0
    %161 = vmatpush2.bf16.msra.mxu0 0
    %162 = vmatprep.subr.bf16.mxu0 0
    %163 = vmatpush2.bf16.msra.mxu0 0
    %164 = vmatprep.subr.bf16.mxu0 0
    %165 = vmatpush2.bf16.msra.mxu0 0
    %166 = vmatprep.subr.bf16.mxu0 0
    %167 = vmatpush2.bf16.msra.mxu0 0
    %168 = vmatprep.subr.bf16.mxu0 0
    %169 = vmatpush2.bf16.msra.mxu0 0
    %170 = vmatprep.mubr.bf16.mxu0 0
    %171 = vmatmul.mubr.bf16.gmra.mxu0 %v129
    %v172 = vpop.f32.mrf.mxu0
    %v173 = vadd.f32 0.0, %v172
    %v174 = vpop.f32.mrf.mxu0
    %v175 = vadd.f32 0.0, %v174
    %v176 = vpop.f32.mrf.mxu0
    %v177 = vpop.f32.mrf.mxu0
    %178 = vdwg.mxu0
    %v183 = vunpack.c.l.b16 %v116
    %v184 = vunpack.c.h.b16 %v116
    %v185 = vunpack.c.l.b16 %v117
    %v186 = vunpack.c.h.b16 %v117
    %v187 = vunpack.c.l.b16 %v118
    %v188 = vunpack.c.h.b16 %v118
    %v189 = vunpack.c.l.b16 %v119
    %v190 = vunpack.c.h.b16 %v119
    %v191 = vpack.c.b16 %v185, %v183
    %v192 = vpack.c.b16 %v186, %v184
    %v193 = vpack.c.b16 %v189, %v187
    %v194 = vpack.c.b16 %v190, %v188
    %vm199 = vcmask 261120
    %v201 = vsel %vm199, %v115, 0
    %203 = vmatprep.subr.bf16.mxu0 0
    %204 = vmatpush1.bf16.msra.mxu0 0
    %205 = vmatprep.subr.bf16.mxu0 0
    %206 = vmatpush1.bf16.msra.mxu0 0
    %207 = vmatprep.subr.bf16.mxu0 0
    %208 = vmatpush1.bf16.msra.mxu0 0
    %209 = vmatprep.subr.bf16.mxu0 0
    %210 = vmatpush1.bf16.msra.mxu0 0
    %211 = vmatprep.subr.bf16.mxu0 0
    %212 = vmatpush1.bf16.msra.mxu0 0
    %213 = vmatprep.subr.bf16.mxu0 0
    %214 = vmatpush1.bf16.msra.mxu0 0
    %215 = vmatprep.subr.bf16.mxu0 %v194
    %216 = vmatpush1.bf16.msra.mxu0 %v193
    %217 = vmatprep.subr.bf16.mxu0 %v192
    %218 = vmatpush1.bf16.msra.mxu0 %v191
    %219 = vmatprep.subr.bf16.mxu0 0
    %220 = vmatpush2.bf16.msra.mxu0 0
    %221 = vmatprep.subr.bf16.mxu0 0
    %222 = vmatpush2.bf16.msra.mxu0 0
    %223 = vmatprep.subr.bf16.mxu0 0
    %224 = vmatpush2.bf16.msra.mxu0 0
    %225 = vmatprep.subr.bf16.mxu0 0
    %226 = vmatpush2.bf16.msra.mxu0 0
    %227 = vmatprep.subr.bf16.mxu0 0
    %228 = vmatpush2.bf16.msra.mxu0 0
    %229 = vmatprep.subr.bf16.mxu0 0
    %230 = vmatpush2.bf16.msra.mxu0 0
    %231 = vmatprep.subr.bf16.mxu0 0
    %232 = vmatpush2.bf16.msra.mxu0 0
    %233 = vmatprep.subr.bf16.mxu0 0
    %234 = vmatpush2.bf16.msra.mxu0 0
    %235 = vmatprep.mubr.bf16.mxu0 0
    %236 = vmatmul.mubr.bf16.gmra.mxu0 %v201
    %v237 = vpop.f32.mrf.mxu0
    %v238 = vadd.f32 %v173, %v237
    %v239 = vpop.f32.mrf.mxu0
    %v240 = vadd.f32 %v175, %v239
    %v241 = vpop.f32.mrf.mxu0
    %v242 = vpop.f32.mrf.mxu0
    %243 = vdwg.mxu0
    %v244 = vld [vmem:[%s4] sm:$0x3]
    %v246 = vlaneseq
    %v247 = vshrl.u32 %v246, 7
    %v248 = vsub.s32 0, %v247
    %v249 = vrot.slane %v244, %v248
    %v250 = vlaneseq
    %v251 = vshrl.u32 %v250, 7
    %v252 = vsub.s32 1, %v251
    %v253 = vrot.slane %v244, %v252
    %v256 = vadd.f32 %v238, %v249
    %v257 = vadd.f32 %v240, %v253
    %v258 = vmax.f32 %v256, 0.0
    %v259 = vmax.f32 %v257, 0.0
    %v260 = vpack.c.bf16 %v258, %v258
    %v261 = vpack.c.bf16 %v259, %v259
    %v262 = vld [vmem:[#allocation4] sm:$0xff]
    %v263 = vld [vmem:[#allocation4 + $0x8] sm:$0xff]
    %v264 = vld [vmem:[#allocation4 + $0x10] sm:$0xff]
    %v265 = vld [vmem:[#allocation4 + $0x18] sm:$0xff]
    %v266 = vld [vmem:[#allocation4 + $0x20] sm:$0xff]
    %v267 = vld [vmem:[#allocation4 + $0x28] sm:$0xff]
    %v268 = vld [vmem:[#allocation4 + $0x30] sm:$0xff]
    %v269 = vld [vmem:[#allocation4 + $0x38] sm:$0xff]
    %v270 = vld [vmem:[#allocation4 + $0x40] sm:$0xff]
    %v271 = vld [vmem:[#allocation4 + $0x48] sm:$0xff]
    %v272 = vld [vmem:[#allocation4 + $0x50] sm:$0xff]
    %v273 = vld [vmem:[#allocation4 + $0x58] sm:$0xff]
    %v274 = vld [vmem:[#allocation4 + $0x60] sm:$0xff]
    %v275 = vld [vmem:[#allocation4 + $0x68] sm:$0xff]
    %v276 = vld [vmem:[#allocation4 + $0x70] sm:$0xff]
    %v277 = vld [vmem:[#allocation4 + $0x78] sm:$0xff]
    %v278 = vld [vmem:[#allocation4 + $0x80] sm:$0xff]
    %v279 = vld [vmem:[#allocation4 + $0x88] sm:$0xff]
    %v280 = vld [vmem:[#allocation4 + $0x90] sm:$0xff]
    %v281 = vld [vmem:[#allocation4 + $0x98] sm:$0xff]
    %v282 = vld [vmem:[#allocation4 + $0xa0] sm:$0xff]
    %v283 = vld [vmem:[#allocation4 + $0xa8] sm:$0xff]
    %v284 = vld [vmem:[#allocation4 + $0xb0] sm:$0xff]
    %v285 = vld [vmem:[#allocation4 + $0xb8] sm:$0xff]
    %v286 = vld [vmem:[#allocation4 + $0xc0] sm:$0xff]
    %v287 = vld [vmem:[#allocation4 + $0xc8] sm:$0xff]
    %v288 = vld [vmem:[#allocation4 + $0xd0] sm:$0xff]
    %v289 = vld [vmem:[#allocation4 + $0xd8] sm:$0xff]
    %v290 = vld [vmem:[#allocation4 + $0xe0] sm:$0xff]
    %v291 = vld [vmem:[#allocation4 + $0xe8] sm:$0xff]
    %v292 = vld [vmem:[#allocation4 + $0xf0] sm:$0xff]
    %v293 = vld [vmem:[#allocation4 + $0xf8] sm:$0xff]
    %v294 = vld [vmem:[%s6] sm:$0x3]
    %v296 = vlaneseq
    %v297 = vshrl.u32 %v296, 7
    %v298 = vsub.s32 0, %v297
    %v299 = vrot.slane %v294, %v298
    %v300 = vlaneseq
    %v301 = vshrl.u32 %v300, 7
    %v302 = vsub.s32 1, %v301
    %v303 = vrot.slane %v294, %v302
    %v338 = vunpack.c.l.b16 %v262
    %v339 = vunpack.c.h.b16 %v262
    %v340 = vunpack.c.l.b16 %v263
    %v341 = vunpack.c.h.b16 %v263
    %v342 = vunpack.c.l.b16 %v264
    %v343 = vunpack.c.h.b16 %v264
    %v344 = vunpack.c.l.b16 %v265
    %v345 = vunpack.c.h.b16 %v265
    %v346 = vunpack.c.l.b16 %v266
    %v347 = vunpack.c.h.b16 %v266
    %v348 = vunpack.c.l.b16 %v267
    %v349 = vunpack.c.h.b16 %v267
    %v350 = vunpack.c.l.b16 %v268
    %v351 = vunpack.c.h.b16 %v268
    %v352 = vunpack.c.l.b16 %v269
    %v353 = vunpack.c.h.b16 %v269
    %v354 = vunpack.c.l.b16 %v270
    %v355 = vunpack.c.h.b16 %v270
    %v356 = vunpack.c.l.b16 %v271
    %v357 = vunpack.c.h.b16 %v271
    %v358 = vunpack.c.l.b16 %v272
    %v359 = vunpack.c.h.b16 %v272
    %v360 = vunpack.c.l.b16 %v273
    %v361 = vunpack.c.h.b16 %v273
    %v362 = vunpack.c.l.b16 %v274
    %v363 = vunpack.c.h.b16 %v274
    %v364 = vunpack.c.l.b16 %v275
    %v365 = vunpack.c.h.b16 %v275
    %v366 = vunpack.c.l.b16 %v276
    %v367 = vunpack.c.h.b16 %v276
    %v368 = vunpack.c.l.b16 %v277
    %v369 = vunpack.c.h.b16 %v277
    %v370 = vunpack.c.l.b16 %v278
    %v371 = vunpack.c.h.b16 %v278
    %v372 = vunpack.c.l.b16 %v279
    %v373 = vunpack.c.h.b16 %v279
    %v374 = vunpack.c.l.b16 %v280
    %v375 = vunpack.c.h.b16 %v280
    %v376 = vunpack.c.l.b16 %v281
    %v377 = vunpack.c.h.b16 %v281
    %v378 = vunpack.c.l.b16 %v282
    %v379 = vunpack.c.h.b16 %v282
    %v380 = vunpack.c.l.b16 %v283
    %v381 = vunpack.c.h.b16 %v283
    %v382 = vunpack.c.l.b16 %v284
    %v383 = vunpack.c.h.b16 %v284
    %v384 = vunpack.c.l.b16 %v285
    %v385 = vunpack.c.h.b16 %v285
    %v386 = vunpack.c.l.b16 %v286
    %v387 = vunpack.c.h.b16 %v286
    %v388 = vunpack.c.l.b16 %v287
    %v389 = vunpack.c.h.b16 %v287
    %v390 = vunpack.c.l.b16 %v288
    %v391 = vunpack.c.h.b16 %v288
    %v392 = vunpack.c.l.b16 %v289
    %v393 = vunpack.c.h.b16 %v289
    %v394 = vunpack.c.l.b16 %v290
    %v395 = vunpack.c.h.b16 %v290
    %v396 = vunpack.c.l.b16 %v291
    %v397 = vunpack.c.h.b16 %v291
    %v398 = vunpack.c.l.b16 %v292
    %v399 = vunpack.c.h.b16 %v292
    %v400 = vunpack.c.l.b16 %v293
    %v401 = vunpack.c.h.b16 %v293
    %v402 = vpack.c.b16 %v340, %v338
    %v403 = vpack.c.b16 %v341, %v339
    %v404 = vpack.c.b16 %v344, %v342
    %v405 = vpack.c.b16 %v345, %v343
    %v406 = vpack.c.b16 %v348, %v346
    %v407 = vpack.c.b16 %v349, %v347
    %v408 = vpack.c.b16 %v352, %v350
    %v409 = vpack.c.b16 %v353, %v351
    %v410 = vpack.c.b16 %v356, %v354
    %v411 = vpack.c.b16 %v357, %v355
    %v412 = vpack.c.b16 %v360, %v358
    %v413 = vpack.c.b16 %v361, %v359
    %v414 = vpack.c.b16 %v364, %v362
    %v415 = vpack.c.b16 %v365, %v363
    %v416 = vpack.c.b16 %v368, %v366
    %v417 = vpack.c.b16 %v369, %v367
    %v418 = vpack.c.b16 %v372, %v370
    %v419 = vpack.c.b16 %v373, %v371
    %v420 = vpack.c.b16 %v376, %v374
    %v421 = vpack.c.b16 %v377, %v375
    %v422 = vpack.c.b16 %v380, %v378
    %v423 = vpack.c.b16 %v381, %v379
    %v424 = vpack.c.b16 %v384, %v382
    %v425 = vpack.c.b16 %v385, %v383
    %v426 = vpack.c.b16 %v388, %v386
    %v427 = vpack.c.b16 %v389, %v387
    %v428 = vpack.c.b16 %v392, %v390
    %v429 = vpack.c.b16 %v393, %v391
    %v430 = vpack.c.b16 %v396, %v394
    %v431 = vpack.c.b16 %v397, %v395
    %v432 = vpack.c.b16 %v400, %v398
    %v433 = vpack.c.b16 %v401, %v399
    %466 = vmatprep.subr.bf16.mxu0 %v417
    %467 = vmatpush1.bf16.msra.mxu0 %v416
    %468 = vmatprep.subr.bf16.mxu0 %v415
    %469 = vmatpush1.bf16.msra.mxu0 %v414
    %470 = vmatprep.subr.bf16.mxu0 %v413
    %471 = vmatpush1.bf16.msra.mxu0 %v412
    %472 = vmatprep.subr.bf16.mxu0 %v411
    %473 = vmatpush1.bf16.msra.mxu0 %v410
    %474 = vmatprep.subr.bf16.mxu0 %v409
    %475 = vmatpush1.bf16.msra.mxu0 %v408
    %476 = vmatprep.subr.bf16.mxu0 %v407
    %477 = vmatpush1.bf16.msra.mxu0 %v406
    %478 = vmatprep.subr.bf16.mxu0 %v405
    %479 = vmatpush1.bf16.msra.mxu0 %v404
    %480 = vmatprep.subr.bf16.mxu0 %v403
    %481 = vmatpush1.bf16.msra.mxu0 %v402
    %482 = vmatprep.subr.bf16.mxu0 %v433
    %483 = vmatpush2.bf16.msra.mxu0 %v432
    %484 = vmatprep.subr.bf16.mxu0 %v431
    %485 = vmatpush2.bf16.msra.mxu0 %v430
    %486 = vmatprep.subr.bf16.mxu0 %v429
    %487 = vmatpush2.bf16.msra.mxu0 %v428
    %488 = vmatprep.subr.bf16.mxu0 %v427
    %489 = vmatpush2.bf16.msra.mxu0 %v426
    %490 = vmatprep.subr.bf16.mxu0 %v425
    %491 = vmatpush2.bf16.msra.mxu0 %v424
    %492 = vmatprep.subr.bf16.mxu0 %v423
    %493 = vmatpush2.bf16.msra.mxu0 %v422
    %494 = vmatprep.subr.bf16.mxu0 %v421
    %495 = vmatpush2.bf16.msra.mxu0 %v420
    %496 = vmatprep.subr.bf16.mxu0 %v419
    %497 = vmatpush2.bf16.msra.mxu0 %v418
    %498 = vmatprep.mubr.bf16.mxu0 %v261
    %499 = vmatmul.mubr.bf16.gmra.mxu0 %v260
    %v500 = vpop.f32.mrf.mxu0
    %v501 = vadd.f32 %v299, %v500
    %v502 = vpop.f32.mrf.mxu0
    %v503 = vadd.f32 %v303, %v502
    %v504 = vpop.f32.mrf.mxu0
    %v505 = vpop.f32.mrf.mxu0
    %506 = vdwg.mxu0
    %v507 = vmax.f32 %v501, 0.0
    %v508 = vmax.f32 %v503, 0.0
    %v509 = vpack.c.bf16 %v507, %v507
    %v510 = vpack.c.bf16 %v508, %v508
    %v511 = vld [vmem:[#allocation6] sm:$0xff]
    %v512 = vld [vmem:[#allocation6 + $0x8] sm:$0xff]
    %v513 = vld [vmem:[#allocation6 + $0x10] sm:$0xff]
    %v514 = vld [vmem:[#allocation6 + $0x18] sm:$0xff]
    %v515 = vld [vmem:[#allocation6 + $0x20] sm:$0xff]
    %v516 = vld [vmem:[#allocation6 + $0x28] sm:$0xff]
    %v517 = vld [vmem:[#allocation6 + $0x30] sm:$0xff]
    %v518 = vld [vmem:[#allocation6 + $0x38] sm:$0xff]
    %v519 = vld [vmem:[#allocation6 + $0x40] sm:$0xff]
    %v520 = vld [vmem:[#allocation6 + $0x48] sm:$0xff]
    %v521 = vld [vmem:[#allocation6 + $0x50] sm:$0xff]
    %v522 = vld [vmem:[#allocation6 + $0x58] sm:$0xff]
    %v523 = vld [vmem:[#allocation6 + $0x60] sm:$0xff]
    %v524 = vld [vmem:[#allocation6 + $0x68] sm:$0xff]
    %v525 = vld [vmem:[#allocation6 + $0x70] sm:$0xff]
    %v526 = vld [vmem:[#allocation6 + $0x78] sm:$0xff]
    %v527 = vld [vmem:[#allocation6 + $0x80] sm:$0xff]
    %v528 = vld [vmem:[#allocation6 + $0x88] sm:$0xff]
    %v529 = vld [vmem:[#allocation6 + $0x90] sm:$0xff]
    %v530 = vld [vmem:[#allocation6 + $0x98] sm:$0xff]
    %v531 = vld [vmem:[#allocation6 + $0xa0] sm:$0xff]
    %v532 = vld [vmem:[#allocation6 + $0xa8] sm:$0xff]
    %v533 = vld [vmem:[#allocation6 + $0xb0] sm:$0xff]
    %v534 = vld [vmem:[#allocation6 + $0xb8] sm:$0xff]
    %v535 = vld [vmem:[#allocation6 + $0xc0] sm:$0xff]
    %v536 = vld [vmem:[#allocation6 + $0xc8] sm:$0xff]
    %v537 = vld [vmem:[#allocation6 + $0xd0] sm:$0xff]
    %v538 = vld [vmem:[#allocation6 + $0xd8] sm:$0xff]
    %v539 = vld [vmem:[#allocation6 + $0xe0] sm:$0xff]
    %v540 = vld [vmem:[#allocation6 + $0xe8] sm:$0xff]
    %v541 = vld [vmem:[#allocation6 + $0xf0] sm:$0xff]
    %v542 = vld [vmem:[#allocation6 + $0xf8] sm:$0xff]
    %v543 = vld [vmem:[#allocation7] sm:$0x3]
    %v545 = vlaneseq
    %v546 = vshrl.u32 %v545, 7
    %v547 = vsub.s32 0, %v546
    %v548 = vrot.slane %v543, %v547
    %v549 = vlaneseq
    %v550 = vshrl.u32 %v549, 7
    %v551 = vsub.s32 1, %v550
    %v552 = vrot.slane %v543, %v551
    %v587 = vunpack.c.l.b16 %v511
    %v588 = vunpack.c.h.b16 %v511
    %v589 = vunpack.c.l.b16 %v512
    %v590 = vunpack.c.h.b16 %v512
    %v591 = vunpack.c.l.b16 %v513
    %v592 = vunpack.c.h.b16 %v513
    %v593 = vunpack.c.l.b16 %v514
    %v594 = vunpack.c.h.b16 %v514
    %v595 = vunpack.c.l.b16 %v515
    %v596 = vunpack.c.h.b16 %v515
    %v597 = vunpack.c.l.b16 %v516
    %v598 = vunpack.c.h.b16 %v516
    %v599 = vunpack.c.l.b16 %v517
    %v600 = vunpack.c.h.b16 %v517
    %v601 = vunpack.c.l.b16 %v518
    %v602 = vunpack.c.h.b16 %v518
    %v603 = vunpack.c.l.b16 %v519
    %v604 = vunpack.c.h.b16 %v519
    %v605 = vunpack.c.l.b16 %v520
    %v606 = vunpack.c.h.b16 %v520
    %v607 = vunpack.c.l.b16 %v521
    %v608 = vunpack.c.h.b16 %v521
    %v609 = vunpack.c.l.b16 %v522
    %v610 = vunpack.c.h.b16 %v522
    %v611 = vunpack.c.l.b16 %v523
    %v612 = vunpack.c.h.b16 %v523
    %v613 = vunpack.c.l.b16 %v524
    %v614 = vunpack.c.h.b16 %v524
    %v615 = vunpack.c.l.b16 %v525
    %v616 = vunpack.c.h.b16 %v525
    %v617 = vunpack.c.l.b16 %v526
    %v618 = vunpack.c.h.b16 %v526
    %v619 = vunpack.c.l.b16 %v527
    %v620 = vunpack.c.h.b16 %v527
    %v621 = vunpack.c.l.b16 %v528
    %v622 = vunpack.c.h.b16 %v528
    %v623 = vunpack.c.l.b16 %v529
    %v624 = vunpack.c.h.b16 %v529
    %v625 = vunpack.c.l.b16 %v530
    %v626 = vunpack.c.h.b16 %v530
    %v627 = vunpack.c.l.b16 %v531
    %v628 = vunpack.c.h.b16 %v531
    %v629 = vunpack.c.l.b16 %v532
    %v630 = vunpack.c.h.b16 %v532
    %v631 = vunpack.c.l.b16 %v533
    %v632 = vunpack.c.h.b16 %v533
    %v633 = vunpack.c.l.b16 %v534
    %v634 = vunpack.c.h.b16 %v534
    %v635 = vunpack.c.l.b16 %v535
    %v636 = vunpack.c.h.b16 %v535
    %v637 = vunpack.c.l.b16 %v536
    %v638 = vunpack.c.h.b16 %v536
    %v639 = vunpack.c.l.b16 %v537
    %v640 = vunpack.c.h.b16 %v537
    %v641 = vunpack.c.l.b16 %v538
    %v642 = vunpack.c.h.b16 %v538
    %v643 = vunpack.c.l.b16 %v539
    %v644 = vunpack.c.h.b16 %v539
    %v645 = vunpack.c.l.b16 %v540
    %v646 = vunpack.c.h.b16 %v540
    %v647 = vunpack.c.l.b16 %v541
    %v648 = vunpack.c.h.b16 %v541
    %v649 = vunpack.c.l.b16 %v542
    %v650 = vunpack.c.h.b16 %v542
    %v651 = vpack.c.b16 %v589, %v587
    %v652 = vpack.c.b16 %v590, %v588
    %v653 = vpack.c.b16 %v593, %v591
    %v654 = vpack.c.b16 %v594, %v592
    %v655 = vpack.c.b16 %v597, %v595
    %v656 = vpack.c.b16 %v598, %v596
    %v657 = vpack.c.b16 %v601, %v599
    %v658 = vpack.c.b16 %v602, %v600
    %v659 = vpack.c.b16 %v605, %v603
    %v660 = vpack.c.b16 %v606, %v604
    %v661 = vpack.c.b16 %v609, %v607
    %v662 = vpack.c.b16 %v610, %v608
    %v663 = vpack.c.b16 %v613, %v611
    %v664 = vpack.c.b16 %v614, %v612
    %v665 = vpack.c.b16 %v617, %v615
    %v666 = vpack.c.b16 %v618, %v616
    %v667 = vpack.c.b16 %v621, %v619
    %v668 = vpack.c.b16 %v622, %v620
    %v669 = vpack.c.b16 %v625, %v623
    %v670 = vpack.c.b16 %v626, %v624
    %v671 = vpack.c.b16 %v629, %v627
    %v672 = vpack.c.b16 %v630, %v628
    %v673 = vpack.c.b16 %v633, %v631
    %v674 = vpack.c.b16 %v634, %v632
    %v675 = vpack.c.b16 %v637, %v635
    %v676 = vpack.c.b16 %v638, %v636
    %v677 = vpack.c.b16 %v641, %v639
    %v678 = vpack.c.b16 %v642, %v640
    %v679 = vpack.c.b16 %v645, %v643
    %v680 = vpack.c.b16 %v646, %v644
    %v681 = vpack.c.b16 %v649, %v647
    %v682 = vpack.c.b16 %v650, %v648
    %715 = vmatprep.subr.bf16.mxu0 %v666
    %716 = vmatpush1.bf16.msra.mxu0 %v665
    %717 = vmatprep.subr.bf16.mxu0 %v664
    %718 = vmatpush1.bf16.msra.mxu0 %v663
    %719 = vmatprep.subr.bf16.mxu0 %v662
    %720 = vmatpush1.bf16.msra.mxu0 %v661
    %721 = vmatprep.subr.bf16.mxu0 %v660
    %722 = vmatpush1.bf16.msra.mxu0 %v659
    %723 = vmatprep.subr.bf16.mxu0 %v658
    %724 = vmatpush1.bf16.msra.mxu0 %v657
    %725 = vmatprep.subr.bf16.mxu0 %v656
    %726 = vmatpush1.bf16.msra.mxu0 %v655
    %727 = vmatprep.subr.bf16.mxu0 %v654
    %728 = vmatpush1.bf16.msra.mxu0 %v653
    %729 = vmatprep.subr.bf16.mxu0 %v652
    %730 = vmatpush1.bf16.msra.mxu0 %v651
    %731 = vmatprep.subr.bf16.mxu0 %v682
    %732 = vmatpush2.bf16.msra.mxu0 %v681
    %733 = vmatprep.subr.bf16.mxu0 %v680
    %734 = vmatpush2.bf16.msra.mxu0 %v679
    %735 = vmatprep.subr.bf16.mxu0 %v678
    %736 = vmatpush2.bf16.msra.mxu0 %v677
    %737 = vmatprep.subr.bf16.mxu0 %v676
    %738 = vmatpush2.bf16.msra.mxu0 %v675
    %739 = vmatprep.subr.bf16.mxu0 %v674
    %740 = vmatpush2.bf16.msra.mxu0 %v673
    %741 = vmatprep.subr.bf16.mxu0 %v672
    %742 = vmatpush2.bf16.msra.mxu0 %v671
    %743 = vmatprep.subr.bf16.mxu0 %v670
    %744 = vmatpush2.bf16.msra.mxu0 %v669
    %745 = vmatprep.subr.bf16.mxu0 %v668
    %746 = vmatpush2.bf16.msra.mxu0 %v667
    %747 = vmatprep.mubr.bf16.mxu0 %v510
    %748 = vmatmul.mubr.bf16.gmra.mxu0 %v509
    %v749 = vpop.f32.mrf.mxu0
    %v750 = vadd.f32 %v548, %v749
    %v751 = vpop.f32.mrf.mxu0
    %v752 = vadd.f32 %v552, %v751
    %v753 = vpop.f32.mrf.mxu0
    %v754 = vpop.f32.mrf.mxu0
    %755 = vdwg.mxu0
    %v756 = vmax.f32 %v750, 0.0
    %v757 = vmax.f32 %v752, 0.0
    %v758 = vpack.c.bf16 %v756, %v756
    %v759 = vpack.c.bf16 %v757, %v757
    %v760 = vld [vmem:[#allocation9] sm:$0xf]
    %v761 = vld [vmem:[#allocation9 + $0x4] sm:$0xf]
    %v762 = vld [vmem:[#allocation9 + $0x8] sm:$0xf]
    %v763 = vld [vmem:[#allocation9 + $0xc] sm:$0xf]
    %v764 = vld [vmem:[#allocation9 + $0x10] sm:$0xf]
    %v765 = vld [vmem:[#allocation9 + $0x14] sm:$0xf]
    %v766 = vld [vmem:[#allocation9 + $0x18] sm:$0xf]
    %v767 = vld [vmem:[#allocation9 + $0x1c] sm:$0xf]
    %v768 = vld [vmem:[#allocation9 + $0x20] sm:$0xf]
    %v769 = vld [vmem:[#allocation9 + $0x24] sm:$0xf]
    %v770 = vld [vmem:[#allocation9 + $0x28] sm:$0xf]
    %v771 = vld [vmem:[#allocation9 + $0x2c] sm:$0xf]
    %v772 = vld [vmem:[#allocation9 + $0x30] sm:$0xf]
    %v773 = vld [vmem:[#allocation9 + $0x34] sm:$0xf]
    %v774 = vld [vmem:[#allocation9 + $0x38] sm:$0xf]
    %v775 = vld [vmem:[#allocation9 + $0x3c] sm:$0xf]
    %v776 = vld [vmem:[#allocation9 + $0x40] sm:$0xf]
    %v777 = vld [vmem:[#allocation9 + $0x44] sm:$0xf]
    %v778 = vld [vmem:[#allocation9 + $0x48] sm:$0xf]
    %v779 = vld [vmem:[#allocation9 + $0x4c] sm:$0xf]
    %v780 = vld [vmem:[#allocation9 + $0x50] sm:$0xf]
    %v781 = vld [vmem:[#allocation9 + $0x54] sm:$0xf]
    %v782 = vld [vmem:[#allocation9 + $0x58] sm:$0xf]
    %v783 = vld [vmem:[#allocation9 + $0x5c] sm:$0xf]
    %v784 = vld [vmem:[#allocation9 + $0x60] sm:$0xf]
    %v785 = vld [vmem:[#allocation9 + $0x64] sm:$0xf]
    %v786 = vld [vmem:[#allocation9 + $0x68] sm:$0xf]
    %v787 = vld [vmem:[#allocation9 + $0x6c] sm:$0xf]
    %v788 = vld [vmem:[#allocation9 + $0x70] sm:$0xf]
    %v789 = vld [vmem:[#allocation9 + $0x74] sm:$0xf]
    %v790 = vld [vmem:[#allocation9 + $0x78] sm:$0xf]
    %v791 = vld [vmem:[#allocation9 + $0x7c] sm:$0xf]
    %v792 = vld [vmem:[#allocation10] sm:$0x1]
    %v794 = vlaneseq
    %v795 = vshrl.u32 %v794, 7
    %v796 = vsub.s32 0, %v795
    %v797 = vrot.slane %v792, %v796
    %v831 = vunpack.c.l.b16 %v760
    %v832 = vunpack.c.l.b16 %v761
    %v833 = vunpack.c.l.b16 %v762
    %v834 = vunpack.c.l.b16 %v763
    %v835 = vunpack.c.l.b16 %v764
    %v836 = vunpack.c.l.b16 %v765
    %v837 = vunpack.c.l.b16 %v766
    %v838 = vunpack.c.l.b16 %v767
    %v839 = vunpack.c.l.b16 %v768
    %v840 = vunpack.c.l.b16 %v769
    %v841 = vunpack.c.l.b16 %v770
    %v842 = vunpack.c.l.b16 %v771
    %v843 = vunpack.c.l.b16 %v772
    %v844 = vunpack.c.l.b16 %v773
    %v845 = vunpack.c.l.b16 %v774
    %v846 = vunpack.c.l.b16 %v775
    %v847 = vunpack.c.l.b16 %v776
    %v848 = vunpack.c.l.b16 %v777
    %v849 = vunpack.c.l.b16 %v778
    %v850 = vunpack.c.l.b16 %v779
    %v851 = vunpack.c.l.b16 %v780
    %v852 = vunpack.c.l.b16 %v781
    %v853 = vunpack.c.l.b16 %v782
    %v854 = vunpack.c.l.b16 %v783
    %v855 = vunpack.c.l.b16 %v784
    %v856 = vunpack.c.l.b16 %v785
    %v857 = vunpack.c.l.b16 %v786
    %v858 = vunpack.c.l.b16 %v787
    %v859 = vunpack.c.l.b16 %v788
    %v860 = vunpack.c.l.b16 %v789
    %v861 = vunpack.c.l.b16 %v790
    %v862 = vunpack.c.l.b16 %v791
    %v863 = vpack.c.b16 %v832, %v831
    %v864 = vpack.c.b16 %v834, %v833
    %v865 = vpack.c.b16 %v836, %v835
    %v866 = vpack.c.b16 %v838, %v837
    %v867 = vpack.c.b16 %v840, %v839
    %v868 = vpack.c.b16 %v842, %v841
    %v869 = vpack.c.b16 %v844, %v843
    %v870 = vpack.c.b16 %v846, %v845
    %v871 = vpack.c.b16 %v848, %v847
    %v872 = vpack.c.b16 %v850, %v849
    %v873 = vpack.c.b16 %v852, %v851
    %v874 = vpack.c.b16 %v854, %v853
    %v875 = vpack.c.b16 %v856, %v855
    %v876 = vpack.c.b16 %v858, %v857
    %v877 = vpack.c.b16 %v860, %v859
    %v878 = vpack.c.b16 %v862, %v861
    %895 = vmatprep.subr.bf16.mxu0 0
    %896 = vmatpush1.bf16.msra.mxu0 %v870
    %897 = vmatprep.subr.bf16.mxu0 0
    %898 = vmatpush1.bf16.msra.mxu0 %v869
    %899 = vmatprep.subr.bf16.mxu0 0
    %900 = vmatpush1.bf16.msra.mxu0 %v868
    %901 = vmatprep.subr.bf16.mxu0 0
    %902 = vmatpush1.bf16.msra.mxu0 %v867
    %903 = vmatprep.subr.bf16.mxu0 0
    %904 = vmatpush1.bf16.msra.mxu0 %v866
    %905 = vmatprep.subr.bf16.mxu0 0
    %906 = vmatpush1.bf16.msra.mxu0 %v865
    %907 = vmatprep.subr.bf16.mxu0 0
    %908 = vmatpush1.bf16.msra.mxu0 %v864
    %909 = vmatprep.subr.bf16.mxu0 0
    %910 = vmatpush1.bf16.msra.mxu0 %v863
    %911 = vmatprep.subr.bf16.mxu0 0
    %912 = vmatpush2.bf16.msra.mxu0 %v878
    %913 = vmatprep.subr.bf16.mxu0 0
    %914 = vmatpush2.bf16.msra.mxu0 %v877
    %915 = vmatprep.subr.bf16.mxu0 0
    %916 = vmatpush2.bf16.msra.mxu0 %v876
    %917 = vmatprep.subr.bf16.mxu0 0
    %918 = vmatpush2.bf16.msra.mxu0 %v875
    %919 = vmatprep.subr.bf16.mxu0 0
    %920 = vmatpush2.bf16.msra.mxu0 %v874
    %921 = vmatprep.subr.bf16.mxu0 0
    %922 = vmatpush2.bf16.msra.mxu0 %v873
    %923 = vmatprep.subr.bf16.mxu0 0
    %924 = vmatpush2.bf16.msra.mxu0 %v872
    %925 = vmatprep.subr.bf16.mxu0 0
    %926 = vmatpush2.bf16.msra.mxu0 %v871
    %927 = vmatprep.mubr.bf16.mxu0 %v759
    %928 = vmatmul.mubr.bf16.gmra.mxu0 %v758
    %v929 = vpop.f32.mrf.mxu0
    %v930 = vadd.f32 %v797, %v929
    %v931 = vpop.f32.mrf.mxu0
    %v932 = vpop.f32.mrf.mxu0
    %v933 = vpop.f32.mrf.mxu0
    %934 = vdwg.mxu0
    %v935 = vtanh.pop %v930
    %936 = vst [vmem:[%s11] sm:$0xff] %v935
    // Predicated region
    $region70: #{actor_ppo_forward.1} parent=1 // pred_check
      _
    $region71: #{actor_ppo_forward.1} parent=1 // pred_check_branch
      %938 = sbr.rel (0) target = $region73
    $region72: #{actor_ppo_forward.1} parent=1 // pred_region
      _
    $region73: #{actor_ppo_forward.1} parent=1 // pred_fallthru
      _
    // Predicated region
    $region74: #{actor_ppo_forward.1} parent=1 // pred_check
      _
    $region75: #{actor_ppo_forward.1} parent=1 // pred_check_branch
      %940 = sbr.rel (0) target = $region77
    $region76: #{actor_ppo_forward.1} parent=1 // pred_region
      _
    $region77: #{actor_ppo_forward.1} parent=1 // pred_fallthru
      _
    %941 = vsyncpa [#allocation3], 1
    %942 = vsyncpa [#allocation5], 1
    %943 = vsyncpa [#allocation8], 1
    %944 = vsyncpa [#allocation11], 1

</llo_original>
